<compile_context>
chip_gen: v7x
topology: tpu7x:2x2x1
jax: 0.10.0
libtpu: 0.0.40
codegen_flags: <defaults>
</compile_context>

<pallas_src>
import functools

import jax
import jax.numpy as jnp
from jax.experimental import pallas as pl
from jax.experimental.pallas import tpu as pltpu

LANE = 128
SUBLANE = 8            # f32 sublane count (fold granularity for the accumulator)
CHUNK_ROWS = 256       # inner-loop chunk: (256,128) f32 = 128 KiB per input
MAX_TILE_ROWS = 4096   # per-grid-step tile: (4096,128) f32 = 2 MiB per input
NUM_CORE_SPLITS = 2    # leading "parallel" grid axis (dual TensorCore on v7x)


def _round_up(x, m):
    return -(-x // m) * m


def _wbce_kernel(y_pred_ref, y_true_ref, out_ref, *,
                 eps, n_valid, tile_rows, tiles_per_core):
    c = pl.program_id(0)          # core-split index (parallel axis)
    i = pl.program_id(1)          # tile index within this core's slab (arbitrary)

    @pl.when(i == 0)
    def _():
        out_ref[...] = jnp.zeros_like(out_ref)

    tile_elems = tile_rows * LANE
    chunk_elems = CHUNK_ROWS * LANE
    n_chunks = tile_rows // CHUNK_ROWS

    # First flat element index covered by this tile (int32 scalar math; fine
    # for inputs below ~2^31 elements).
    tile_base = (c * tiles_per_core + i) * tile_elems
    valid_in_tile = n_valid - tile_base

    @pl.loop(0, n_chunks)
    def _(j):
        r0 = pl.multiple_of(j * CHUNK_ROWS, CHUNK_ROWS)
        p = y_pred_ref[pl.ds(r0, CHUNK_ROWS), :].astype(jnp.float32)
        y = y_true_ref[pl.ds(r0, CHUNK_ROWS), :].astype(jnp.float32)

        p = jnp.clip(p, jnp.float32(eps), jnp.float32(1.0 - eps))
        # s = y*log(p) + (1-y)*log(1-p); negate / *sample_weight / /N /
        # *pos_ratio are uniform and applied once on the scalar in the wrapper.
        s = y * jnp.log(p) + (1.0 - y) * jnp.log(1.0 - p)

        def fold(v):
            # (CHUNK_ROWS,128) -> (CHUNK_ROWS/8, 8, 128) -> sum over the leading
            # axis: pure vreg-to-vreg VPU adds, no cross-lane XLU work.
            return v.reshape(CHUNK_ROWS // SUBLANE, SUBLANE, LANE).sum(axis=0)

        valid_here = valid_in_tile - j * chunk_elems

        @pl.when(valid_here >= chunk_elems)       # fully valid chunk (hot path)
        def _():
            out_ref[...] += fold(s)

        @pl.when((valid_here > 0) & (valid_here < chunk_elems))   # boundary chunk
        def _():
            rid = jax.lax.broadcasted_iota(jnp.int32, (CHUNK_ROWS, LANE), 0)
            lid = jax.lax.broadcasted_iota(jnp.int32, (CHUNK_ROWS, LANE), 1)
            mask = rid * LANE + lid < valid_here
            out_ref[...] += fold(jnp.where(mask, s, jnp.float32(0.0)))
        # valid_here <= 0: chunk is entirely padding -> contributes nothing.


def weighted_binary_cross_entropy(y_pred, y_true, pos_ratio):
    """Pallas implementation of WeightedBinaryCrossEntropy.forward.

    Returns a 0-dim float32 scalar (matches the PyTorch 0-dim output)."""
    neg_ratio = 1.0 - pos_ratio
    sample_weight = neg_ratio / pos_ratio
    if jnp.issubdtype(y_pred.dtype, jnp.floating):
        eps = float(jnp.finfo(y_pred.dtype).eps)
    else:
        eps = float(jnp.finfo(jnp.float32).eps)

    n_valid = int(y_pred.size)
    assert int(y_true.size) == n_valid

    # Tiling: split rows across NUM_CORE_SPLITS contiguous slabs, each slab
    # covered by whole tiles of tile_rows (multiple of 256 -> sublane safe for
    # f32/bf16/int8).  Pad to full tiles with benign values; padding is masked
    # in-kernel, so no reliance on out-of-bounds block contents.
    rows = -(-n_valid // LANE)
    rows_per_core = -(-rows // NUM_CORE_SPLITS)
    tiles_per_core = max(1, -(-rows_per_core // MAX_TILE_ROWS))
    tile_rows = _round_up(max(1, -(-rows_per_core // tiles_per_core)), CHUNK_ROWS)
    rows_half = tiles_per_core * tile_rows
    total_elems = NUM_CORE_SPLITS * rows_half * LANE
    pad = total_elems - n_valid

    flat_p = y_pred.reshape(-1)
    flat_y = y_true.reshape(-1)
    if pad:
        flat_p = jnp.pad(flat_p, (0, pad), constant_values=0.5)
        flat_y = jnp.pad(flat_y, (0, pad), constant_values=0)

    p3 = flat_p.reshape(NUM_CORE_SPLITS, rows_half, LANE)
    y3 = flat_y.reshape(NUM_CORE_SPLITS, rows_half, LANE)

    kernel = functools.partial(
        _wbce_kernel,
        eps=eps,
        n_valid=n_valid,
        tile_rows=tile_rows,
        tiles_per_core=tiles_per_core,
    )

    partials = pl.pallas_call(
        kernel,
        out_shape=jax.ShapeDtypeStruct(
            (NUM_CORE_SPLITS, SUBLANE, LANE), jnp.float32),
        grid=(NUM_CORE_SPLITS, tiles_per_core),
        in_specs=[
            pl.BlockSpec((None, tile_rows, LANE), lambda c, i: (c, i, 0)),
            pl.BlockSpec((None, tile_rows, LANE), lambda c, i: (c, i, 0)),
        ],
        out_specs=pl.BlockSpec((None, SUBLANE, LANE), lambda c, i: (c, 0, 0)),
        compiler_params=pltpu.CompilerParams(
            dimension_semantics=("parallel", "arbitrary"),
            vmem_limit_bytes=32 * 1024 * 1024),
    )(p3, y3)

    total = jnp.sum(partials)                 # tiny (2,8,128) reduce in XLA
    loss = (-total / jnp.float32(n_valid)) * jnp.float32(sample_weight)
    return loss * jnp.float32(pos_ratio)      # mean over dim=-1 of a scalar: no-op


def _reference(y_pred, y_true, pos_ratio):
    """Pure-JAX reference mirroring the PyTorch module (stable logits form)."""
    neg_ratio = 1.0 - pos_ratio
    sample_weight = neg_ratio / pos_ratio
    eps = jnp.finfo(jnp.float32).eps
    y = y_true.astype(jnp.float32)
    p = jnp.clip(y_pred.astype(jnp.float32), eps, 1.0 - eps)
    x = jnp.log(p / (1.0 - p))
    l = jnp.maximum(x, 0.0) - x * y + jnp.log1p(jnp.exp(-jnp.abs(x)))
    loss = jnp.mean(l * sample_weight)        # scalar ('mean' reduction)
    return loss * pos_ratio                   # mean over dim=-1 of a scalar: no-op


if __name__ == "__main__":
    key = jax.random.PRNGKey(0)
    k1, k2 = jax.random.split(key)

    # Inputs consistent with a per-pixel binary prediction map (NCHW-ish).
    shape = (2, 4, 16, 16)
    y_pred = jax.random.uniform(k1, shape, dtype=jnp.float32,
                                minval=0.0, maxval=1.0)
    y_true = (jax.random.uniform(k2, shape, dtype=jnp.float32) > 0.7).astype(
        jnp.float32)

    pos_ratio = 0.3  # deterministic constructor parameter

    out = weighted_binary_cross_entropy(y_pred, y_true, pos_ratio)
    out = jax.block_until_ready(out)

    ref = _reference(y_pred, y_true, pos_ratio)
    assert jnp.allclose(out, ref, rtol=1e-5, atol=1e-6), (out, ref)

    print("KERNEL_OK")
</pallas_src>

<mosaic_0001>
module attributes {stable_mosaic.version = 11 : i64} {
  func.func @_wbce_kernel(%arg0: i32, %arg1: i32, %arg2: memref<1x256x128xf32, #tpu.memory_space<vmem>>, %arg3: memref<1x256x128xf32, #tpu.memory_space<vmem>>, %arg4: memref<1x8x128xf32, #tpu.memory_space<vmem>>) attributes {dimension_semantics = [#tpu.dimension_semantics<parallel>, #tpu.dimension_semantics<arbitrary>], iteration_bounds = array<i64: 2, 1>, scalar_prefetch = 0 : i64, scratch_operands = 0 : i64, tpu.core_type = #tpu.core_type<tc>, window_params = [{transform_indices = @transform_0, window_bounds = array<i64: 1, 256, 128>}, {transform_indices = @transform_1, window_bounds = array<i64: 1, 256, 128>}, {transform_indices = @transform_2, window_bounds = array<i64: 1, 8, 128>}]} {
    %c0_i32 = arith.constant 0 : i32
    %0 = arith.cmpi eq, %arg1, %c0_i32 : i32
    %1 = arith.extui %0 : i1 to i32
    %c0_i32_0 = arith.constant 0 : i32
    %2 = arith.cmpi ne, %1, %c0_i32_0 : i32
    scf.if %2 {
      %cst_17 = arith.constant 0.000000e+00 : f32
      %40 = vector.broadcast %cst_17 : f32 to vector<8x128xf32>
      %c0_18 = arith.constant 0 : index
      %c0_19 = arith.constant 0 : index
      %c0_20 = arith.constant 0 : index
      %41 = vector.load %arg4[%c0_18, %c0_19, %c0_20] : memref<1x8x128xf32, #tpu.memory_space<vmem>>, vector<1x8x128xf32>
      %42 = vector.shape_cast %41 : vector<1x8x128xf32> to vector<8x128xf32>
      %43 = vector.shape_cast %40 : vector<8x128xf32> to vector<1x8x128xf32>
      tpu.vector_store %arg4[%c0_18, %c0_19, %c0_20], %43 {strides = array<i32>} : memref<1x8x128xf32, #tpu.memory_space<vmem>>, vector<1x8x128xf32>,
    } else {
    }
    %c1_i32 = arith.constant 1 : i32
    %3 = arith.muli %arg0, %c1_i32 : i32
    %4 = arith.addi %3, %arg1 : i32
    %c32768_i32 = arith.constant 32768 : i32
    %5 = arith.muli %4, %c32768_i32 : i32
    %c2048_i32 = arith.constant 2048 : i32
    %6 = arith.subi %c2048_i32, %5 : i32
    %c0_i32_1 = arith.constant 0 : i32
    %c1_i32_2 = arith.constant 1 : i32
    %7 = arith.muli %c0_i32_1, %c1_i32_2 : i32
    %c0_i32_3 = arith.constant 0 : i32
    %8 = arith.addi %c0_i32_3, %7 : i32
    %c256_i32 = arith.constant 256 : i32
    %9 = arith.muli %8, %c256_i32 : i32
    %10 = tpu.assume_multiple %9, 256 : i32
    %c0 = arith.constant 0 : index
    %11 = arith.index_cast %10 : i32 to index
    %c0_4 = arith.constant 0 : index
    %12 = vector.load %arg2[%c0, %11, %c0_4] : memref<1x256x128xf32, #tpu.memory_space<vmem>>, vector<1x256x128xf32>
    %13 = vector.shape_cast %12 : vector<1x256x128xf32> to vector<256x128xf32>
    %c0_5 = arith.constant 0 : index
    %14 = arith.index_cast %10 : i32 to index
    %c0_6 = arith.constant 0 : index
    %15 = vector.load %arg3[%c0_5, %14, %c0_6] : memref<1x256x128xf32, #tpu.memory_space<vmem>>, vector<1x256x128xf32>
    %16 = vector.shape_cast %15 : vector<1x256x128xf32> to vector<256x128xf32>
    %cst = arith.constant 1.1920929E-7 : f32
    %cst_7 = arith.constant 0.99999988 : f32
    %17 = vector.broadcast %cst : f32 to vector<256x128xf32>
    %18 = arith.maximumf %17, %13 : vector<256x128xf32>
    %19 = vector.broadcast %cst_7 : f32 to vector<256x128xf32>
    %20 = arith.minimumf %19, %18 : vector<256x128xf32>
    %21 = math.log %20 : vector<256x128xf32>
    %22 = arith.mulf %16, %21 : vector<256x128xf32>
    %cst_8 = arith.constant 1.000000e+00 : f32
    %23 = vector.broadcast %cst_8 : f32 to vector<256x128xf32>
    %24 = arith.subf %23, %16 : vector<256x128xf32>
    %cst_9 = arith.constant 1.000000e+00 : f32
    %25 = vector.broadcast %cst_9 : f32 to vector<256x128xf32>
    %26 = arith.subf %25, %20 : vector<256x128xf32>
    %27 = math.log %26 : vector<256x128xf32>
    %28 = arith.mulf %24, %27 : vector<256x128xf32>
    %29 = arith.addf %22, %28 : vector<256x128xf32>
    %c32768_i32_10 = arith.constant 32768 : i32
    %30 = arith.muli %8, %c32768_i32_10 : i32
    %31 = arith.subi %6, %30 : i32
    %c32768_i32_11 = arith.constant 32768 : i32
    %32 = arith.cmpi sge, %31, %c32768_i32_11 : i32
    %33 = arith.extui %32 : i1 to i32
    %c0_i32_12 = arith.constant 0 : i32
    %34 = arith.cmpi ne, %33, %c0_i32_12 : i32
    scf.if %34 {
      %c0_17 = arith.constant 0 : index
      %c0_18 = arith.constant 0 : index
      %c0_19 = arith.constant 0 : index
      %40 = vector.load %arg4[%c0_17, %c0_18, %c0_19] : memref<1x8x128xf32, #tpu.memory_space<vmem>>, vector<1x8x128xf32>
      %41 = vector.shape_cast %40 : vector<1x8x128xf32> to vector<8x128xf32>
      %42 = vector.shape_cast %29 : vector<256x128xf32> to vector<32x8x128xf32>
      %cst_20 = arith.constant dense<0.000000e+00> : vector<8x128xf32>
      %43 = vector.multi_reduction <add>, %42, %cst_20 [0] : vector<32x8x128xf32> to vector<8x128xf32>
      %44 = arith.addf %41, %43 : vector<8x128xf32>
      %c0_21 = arith.constant 0 : index
      %c0_22 = arith.constant 0 : index
      %c0_23 = arith.constant 0 : index
      %45 = vector.load %arg4[%c0_21, %c0_22, %c0_23] : memref<1x8x128xf32, #tpu.memory_space<vmem>>, vector<1x8x128xf32>
      %46 = vector.shape_cast %45 : vector<1x8x128xf32> to vector<8x128xf32>
      %47 = vector.shape_cast %44 : vector<8x128xf32> to vector<1x8x128xf32>
      tpu.vector_store %arg4[%c0_21, %c0_22, %c0_23], %47 {strides = array<i32>} : memref<1x8x128xf32, #tpu.memory_space<vmem>>, vector<1x8x128xf32>,
    } else {
    }
    %c0_i32_13 = arith.constant 0 : i32
    %35 = arith.cmpi sgt, %31, %c0_i32_13 : i32
    %c32768_i32_14 = arith.constant 32768 : i32
    %36 = arith.cmpi slt, %31, %c32768_i32_14 : i32
    %37 = arith.andi %35, %36 : i1
    %38 = arith.extui %37 : i1 to i32
    %c0_i32_15 = arith.constant 0 : i32
    %39 = arith.cmpi ne, %38, %c0_i32_15 : i32
    scf.if %39 {
      %40 = tpu.iota {dimensions = array<i32: 0>} : vector<256x128xi32>
      %41 = tpu.iota {dimensions = array<i32: 1>} : vector<256x128xi32>
      %c128_i32 = arith.constant 128 : i32
      %42 = vector.broadcast %c128_i32 : i32 to vector<256x128xi32>
      %43 = arith.muli %40, %42 : vector<256x128xi32>
      %44 = arith.addi %43, %41 : vector<256x128xi32>
      %45 = vector.broadcast %31 : i32 to vector<256x128xi32>
      %46 = arith.cmpi slt, %44, %45 : vector<256x128xi32>
      %c0_17 = arith.constant 0 : index
      %c0_18 = arith.constant 0 : index
      %c0_19 = arith.constant 0 : index
      %47 = vector.load %arg4[%c0_17, %c0_18, %c0_19] : memref<1x8x128xf32, #tpu.memory_space<vmem>>, vector<1x8x128xf32>
      %48 = vector.shape_cast %47 : vector<1x8x128xf32> to vector<8x128xf32>
      %cst_20 = arith.constant 0.000000e+00 : f32
      %49 = vector.broadcast %cst_20 : f32 to vector<256x128xf32>
      %50 = arith.select %46, %29, %49 : vector<256x128xi1>, vector<256x128xf32>
      %51 = vector.shape_cast %50 : vector<256x128xf32> to vector<32x8x128xf32>
      %cst_21 = arith.constant dense<0.000000e+00> : vector<8x128xf32>
      %52 = vector.multi_reduction <add>, %51, %cst_21 [0] : vector<32x8x128xf32> to vector<8x128xf32>
      %53 = arith.addf %48, %52 : vector<8x128xf32>
      %c0_22 = arith.constant 0 : index
      %c0_23 = arith.constant 0 : index
      %c0_24 = arith.constant 0 : index
      %54 = vector.load %arg4[%c0_22, %c0_23, %c0_24] : memref<1x8x128xf32, #tpu.memory_space<vmem>>, vector<1x8x128xf32>
      %55 = vector.shape_cast %54 : vector<1x8x128xf32> to vector<8x128xf32>
      %56 = vector.shape_cast %53 : vector<8x128xf32> to vector<1x8x128xf32>
      tpu.vector_store %arg4[%c0_22, %c0_23, %c0_24], %56 {strides = array<i32>} : memref<1x8x128xf32, #tpu.memory_space<vmem>>, vector<1x8x128xf32>,
    } else {
    }
    %c1_i32_16 = arith.constant 1 : i32
    return
  }
  func.func @transform_0(%arg0: i32, %arg1: i32) -> (i32, i32, i32) {
    %c0_i32 = arith.constant 0 : i32
    %c0_i32_0 = arith.constant 0 : i32
    return %arg0, %arg1, %c0_i32 : i32, i32, i32
  }
  func.func @transform_1(%arg0: i32, %arg1: i32) -> (i32, i32, i32) {
    %c0_i32 = arith.constant 0 : i32
    %c0_i32_0 = arith.constant 0 : i32
    return %arg0, %arg1, %c0_i32 : i32, i32, i32
  }
  func.func @transform_2(%arg0: i32, %arg1: i32) -> (i32, i32, i32) {
    %c0_i32 = arith.constant 0 : i32
    %c0_i32_0 = arith.constant 0 : i32
    %c0_i32_1 = arith.constant 0 : i32
    return %arg0, %c0_i32, %c0_i32_0 : i32, i32, i32
  }
}

</mosaic_0001>

<llo_original>
// kernel: tpu_custom_call.1
$region0: #{tpu_custom_call.1}
  #allocation0 [shape = 'u32[]', space=smem, size = 0x4, offset = 0x4, fixed_abs, tag = 'smem constant byte address 0x4 - core index']
  #allocation1 [shape = 'u32[144,128]{1,0:T(1,128)}', space=vmem, size = 0x12000, scoped, tag = 'internal scratch']
  %s0 = inlined_call_operand.hbm [shape: f32[2,256,128], index: 0, kind: input, shape index: {}]
  %s1 = inlined_call_operand.hbm [shape: f32[2,256,128], index: 1, kind: input, shape index: {}]
  %s2 = inlined_call_operand.hbm [shape: f32[2,8,128], index: 2, kind: output, shape index: {}]
  %s3 = sld [smem:[#allocation0]]
  $region61: #{tpu_custom_call.1} parent=0
    _
  %s5 = ssub.s32 1, %s3
  %s6 = scalar_select 0, %s5, %s3
  $region1: #{tpu_custom_call.1} parent=0
    #allocation2 [shape = 'u8[262144]{0}', space=vmem, size = 0x40000, scoped, tag = 'input window, operand 0']
    #allocation3 [shape = 's32[2]{0}', space=sflag, size = 0x8, scoped, tag = 'scoped memory for tpu_custom_call.1']
    #allocation4 [shape = 's32[2]{0}', space=sflag, size = 0x8, scoped, tag = 'scoped memory for tpu_custom_call.1']
    #allocation5 [shape = 'u8[262144]{0}', space=vmem, size = 0x40000, scoped, tag = 'input window, operand 1']
    #allocation6 [shape = 's32[2]{0}', space=sflag, size = 0x8, scoped, tag = 'scoped memory for tpu_custom_call.1']
    #allocation7 [shape = 'u8[8192]{0}', space=vmem, size = 0x2000, scoped, tag = 'output window, operand 0']
    %7 = vsyncpa [#allocation3], 0
    %s8 = scalar_lea.sflag [#allocation3], 1
    %9 = vsyncpa %s8, 0
    %10 = vsyncpa [#allocation6], 0
    %s11 = scalar_lea.sflag [#allocation6], 1
    %12 = vsyncpa %s11, 0
    %13 = vsyncpa [#allocation4], 0
    %s14 = scalar_lea.sflag [#allocation4], 1
    %15 = vsyncpa %s14, 0
    loop: start=0, step=1, limit=4
    $region2: #{tpu_custom_call.1} parent=1 // loop_pre_header
      _
    $region3: #{tpu_custom_call.1} parent=1 // loop_header
      %s17 = sphi 0, %s21
      %p18 = scmp.ge.s32.totalorder %s17, 4
      %s24 = sphi 0, %s36
      %s25 = sphi 0, %s32
      %s26 = sphi 0, %s24
      %s27 = sphi 0, %s25
      %s28 = sphi 0, %s26
      %s29 = sphi 0, %s27
      %s41 = sphi 0, %s43
      %s44 = sphi 0, %s41
      %s45 = sphi 0, %s44
      %s61 = sphi 0, %s45
      %s69 = sphi 0, %s71
      %s72 = sphi 0, %s69
      %s73 = sphi 0, %s72
      %s89 = sphi 0, %s73
      %s95 = sphi 0, %s97
      %s98 = sphi 0, %s95
      %s99 = sphi 0, %s98
      %s115 = sphi 0, %s99
    $region4: #{tpu_custom_call.1} parent=1 // loop_header_branch
      %20 = sbr.rel (%p18) target = $region8
    $region5: #{tpu_custom_call.1} parent=1 // loop_body
      %s22 = ssub.s32 %s17, 1
      %s23 = ssub.s32 %s17, 2
      %s30 = sadd.s32 1, %s25
      %p31 = scmp.ge.s32.totalorder %s30, 1
      %s32 = scalar_select %p31, 0, %s30
      %s33 = sadd.s32 1, %s24
      %s34 = scalar_select %p31, %s33, %s24
      %p35 = scmp.ge.s32.totalorder %s34, 2
      %s36 = scalar_select %p35, 0, %s34
      %s37 = ssub.s32 %s24, %s36
      %s38 = ssub.s32 %s25, %s32
      %s39 = sor.u32 %s37, %s38
      %p40 = scmp.eq.s32.totalorder %s39, 0
      %s42 = sadd.s32 %s41, 1
      %s43 = scalar_select %p40, %s41, %s42
      %p46 = pneg %p40
      %p47 = scmp.eq.s32.totalorder %s17, 1
      %p48 = por %p46, %p47
      %p49 = scmp.ne.s32.totalorder %s41, %s44
      %p50 = scmp.eq.s32.totalorder %s17, 0
      %p51 = por %p49, %p50
      %p52 = scmp.ne.s32.totalorder %s41, %s44
      %p53 = scmp.eq.s32.totalorder %s22, 1
      %p54 = por %p52, %p53
      %p55 = scmp.ne.s32.totalorder %s44, %s45
      %p56 = scmp.eq.s32.totalorder %s22, 0
      %p57 = por %p55, %p56
      %p58 = scmp.ne.s32.totalorder %s44, %s45
      %p59 = scmp.eq.s32.totalorder %s23, 1
      %p60 = por %p58, %p59
      %p62 = scmp.ne.s32.totalorder %s45, %s61
      %p63 = scmp.eq.s32.totalorder %s23, 0
      %p64 = por %p62, %p63
      %s65 = ssub.s32 %s24, %s36
      %s66 = ssub.s32 %s25, %s32
      %s67 = sor.u32 %s65, %s66
      %p68 = scmp.eq.s32.totalorder %s67, 0
      %s70 = sadd.s32 %s69, 1
      %s71 = scalar_select %p68, %s69, %s70
      %p74 = pneg %p68
      %p75 = scmp.eq.s32.totalorder %s17, 1
      %p76 = por %p74, %p75
      %p77 = scmp.ne.s32.totalorder %s69, %s72
      %p78 = scmp.eq.s32.totalorder %s17, 0
      %p79 = por %p77, %p78
      %p80 = scmp.ne.s32.totalorder %s69, %s72
      %p81 = scmp.eq.s32.totalorder %s22, 1
      %p82 = por %p80, %p81
      %p83 = scmp.ne.s32.totalorder %s72, %s73
      %p84 = scmp.eq.s32.totalorder %s22, 0
      %p85 = por %p83, %p84
      %p86 = scmp.ne.s32.totalorder %s72, %s73
      %p87 = scmp.eq.s32.totalorder %s23, 1
      %p88 = por %p86, %p87
      %p90 = scmp.ne.s32.totalorder %s73, %s89
      %p91 = scmp.eq.s32.totalorder %s23, 0
      %p92 = por %p90, %p91
      %s93 = ssub.s32 %s24, %s36
      %p94 = scmp.eq.s32.totalorder %s93, 0
      %s96 = sadd.s32 %s95, 1
      %s97 = scalar_select %p94, %s95, %s96
      %p100 = pneg %p94
      %p101 = scmp.eq.s32.totalorder %s17, 1
      %p102 = por %p100, %p101
      %p103 = scmp.ne.s32.totalorder %s95, %s98
      %p104 = scmp.eq.s32.totalorder %s17, 0
      %p105 = por %p103, %p104
      %p106 = scmp.ne.s32.totalorder %s95, %s98
      %p107 = scmp.eq.s32.totalorder %s22, 1
      %p108 = por %p106, %p107
      %p109 = scmp.ne.s32.totalorder %s98, %s99
      %p110 = scmp.eq.s32.totalorder %s22, 0
      %p111 = por %p109, %p110
      %p112 = scmp.ne.s32.totalorder %s98, %s99
      %p113 = scmp.eq.s32.totalorder %s23, 1
      %p114 = por %p112, %p113
      %p116 = scmp.ne.s32.totalorder %s99, %s115
      %p117 = scmp.eq.s32.totalorder %s23, 0
      %p118 = por %p116, %p117
      %p119 = scmp.le.s32.totalorder 1, %s17
      %p120 = scmp.lt.s32.totalorder %s17, 3
      %p121 = pnand %p119, %p120
      %p122 = pneg %p121
      // Predicated region
      $region9: #{tpu_custom_call.1} parent=5 // pred_check
        _
      $region10: #{tpu_custom_call.1} parent=5 // pred_check_branch
        %124 = sbr.rel (%p121) target = $region12
      $region11: #{tpu_custom_call.1} parent=5 // pred_region
        %s125 = ssub.s32 %s17, 1
      $region12: #{tpu_custom_call.1} parent=5 // pred_fallthru
        _
      %p126 = scmp.lt.s32.totalorder %s17, 2
      // Predicated region
      $region13: #{tpu_custom_call.1} parent=5 // pred_check
        %p127 = pneg %p126
      $region14: #{tpu_custom_call.1} parent=5 // pred_check_branch
        %129 = sbr.rel (%p127) target = $region16
      $region15: #{tpu_custom_call.1} parent=5 // pred_region
        // Predicated region
        $region17: #{tpu_custom_call.1} parent=15 // pred_check
          %p130 = pneg %p51
        $region18: #{tpu_custom_call.1} parent=15 // pred_check_branch
          %132 = sbr.rel (%p130) target = $region20
        $region19: #{tpu_custom_call.1} parent=15 // pred_region
          %s133 = sand.u32 %s41, 1
          %s134 = scalar_lea.sflag [#allocation3], %s133
          %s135 = sand.u32 %s41, 1
          %s136 = smul.addr %s135, 256
          %s137 = scalar_lea.vmem [#allocation2], %s136
          %s138 = smul.u32 32, %s25
          %s140 = ssub.s32 4096, 4096
          %141 = vsyncadd %s134, %s140
          %s142 = smul.addr %s24, 32
          %s143 = sadd.s32 %s138, %s142
          %s144 = smul.addr %s143, 128
          %s145 = scalar_lea.hbm %s0, %s144
          %s146 = sshll.u32 %s137, 4
          %s147 = int_to_ptr.vmem [resolvable:$true] %s146
          %152 = dma.hbm_to_vmem [thread:$0]  %s145, 4096, %s147, %s134, 128, 128, 8
        $region20: #{tpu_custom_call.1} parent=15 // pred_fallthru
          _
        // Predicated region
        $region21: #{tpu_custom_call.1} parent=15 // pred_check
          %p153 = pneg %p79
        $region22: #{tpu_custom_call.1} parent=15 // pred_check_branch
          %155 = sbr.rel (%p153) target = $region24
        $region23: #{tpu_custom_call.1} parent=15 // pred_region
          %s156 = sand.u32 %s69, 1
          %s157 = scalar_lea.sflag [#allocation6], %s156
          %s158 = sand.u32 %s69, 1
          %s159 = smul.addr %s158, 256
          %s160 = scalar_lea.vmem [#allocation5], %s159
          %s161 = smul.u32 32, %s25
          %s163 = ssub.s32 4096, 4096
          %164 = vsyncadd %s157, %s163
          %s165 = smul.addr %s24, 32
          %s166 = sadd.s32 %s161, %s165
          %s167 = smul.addr %s166, 128
          %s168 = scalar_lea.hbm %s1, %s167
          %s169 = sshll.u32 %s160, 4
          %s170 = int_to_ptr.vmem [resolvable:$true] %s169
          %175 = dma.hbm_to_vmem [thread:$0]  %s168, 4096, %s170, %s157, 128, 128, 8
        $region24: #{tpu_custom_call.1} parent=15 // pred_fallthru
          _
      $region16: #{tpu_custom_call.1} parent=5 // pred_fallthru
        _
      %p176 = scmp.le.s32.totalorder 1, %s17
      %p177 = scmp.lt.s32.totalorder %s17, 3
      %p178 = pnand %p176, %p177
      %p179 = pneg %p178
      // Predicated region
      $region25: #{tpu_custom_call.1} parent=5 // pred_check
        _
      $region26: #{tpu_custom_call.1} parent=5 // pred_check_branch
        %181 = sbr.rel (%p178) target = $region28
      $region27: #{tpu_custom_call.1} parent=5 // pred_region
        %s182 = ssub.s32 %s17, 1
        %s183 = sand.u32 %s44, 1
        %s184 = scalar_lea.sflag [#allocation3], %s183
        %s185 = sand.u32 %s44, 1
        %s186 = smul.addr %s185, 256
        %s187 = scalar_lea.vmem [#allocation2], %s186
        // Predicated region
        $region29: #{tpu_custom_call.1} parent=27 // pred_check
          %p188 = pneg %p57
        $region30: #{tpu_custom_call.1} parent=27 // pred_check_branch
          %190 = sbr.rel (%p188) target = $region32
        $region31: #{tpu_custom_call.1} parent=27 // pred_region
          %191 = dma.done %s184, 4096
        $region32: #{tpu_custom_call.1} parent=27 // pred_fallthru
          _
        %s192 = sand.u32 %s72, 1
        %s193 = scalar_lea.sflag [#allocation6], %s192
        %s194 = sand.u32 %s72, 1
        %s195 = smul.addr %s194, 256
        %s196 = scalar_lea.vmem [#allocation5], %s195
        // Predicated region
        $region33: #{tpu_custom_call.1} parent=27 // pred_check
          %p197 = pneg %p85
        $region34: #{tpu_custom_call.1} parent=27 // pred_check_branch
          %199 = sbr.rel (%p197) target = $region36
        $region35: #{tpu_custom_call.1} parent=27 // pred_region
          %200 = dma.done %s193, 4096
        $region36: #{tpu_custom_call.1} parent=27 // pred_fallthru
          _
        %s201 = sand.u32 %s44, 1
        %s202 = scalar_lea.sflag [#allocation3], %s201
        %s203 = sand.u32 %s44, 1
        %s204 = smul.addr %s203, 256
        %s205 = scalar_lea.vmem [#allocation2], %s204
        %p206 = pneg %p57
        %p207 = pneg %p54
        %s208 = sand.u32 %s72, 1
        %s209 = scalar_lea.sflag [#allocation6], %s208
        %s210 = sand.u32 %s72, 1
        %s211 = smul.addr %s210, 256
        %s212 = scalar_lea.vmem [#allocation5], %s211
        %p213 = pneg %p85
        %p214 = pneg %p82
        %p215 = pneg %p111
        %p216 = pneg %p108
        %s217 = sand.u32 %s98, 1
        %s218 = scalar_lea.sflag [#allocation4], %s217
        %s219 = sand.u32 %s98, 1
        %s220 = smul.addr %s219, 8
        %s221 = scalar_lea.vmem [#allocation7], %s220
        %s222 = smul.u32 32, %s27
        %s223 = smul.u32 32, %s27
        %p224 = scmp.eq.s32.totalorder %s27, 0
        // Predicated region
        $region37: #{tpu_custom_call.1} parent=27 // pred_check
          %p225 = pneg %p224
        $region38: #{tpu_custom_call.1} parent=27 // pred_check_branch
          %227 = sbr.rel (%p225) target = $region40
        $region39: #{tpu_custom_call.1} parent=27 // pred_region
          %228 = vst [vmem:[%s221] sm:$0xff] 0.0
        $region40: #{tpu_custom_call.1} parent=27 // pred_fallthru
          _
        %s229 = sadd.s32 %s26, %s27
        %s230 = smul.u32 %s229, 32768
        %s231 = ssub.s32 2048, %s230
        %v232 = vld [vmem:[%s187] sm:$0xff]
        %v233 = vld [vmem:[%s187 + $0x8] sm:$0xff]
        %v234 = vld [vmem:[%s187 + $0x10] sm:$0xff]
        %v235 = vld [vmem:[%s187 + $0x18] sm:$0xff]
        %v236 = vld [vmem:[%s187 + $0x20] sm:$0xff]
        %v237 = vld [vmem:[%s187 + $0x28] sm:$0xff]
        %v238 = vld [vmem:[%s187 + $0x30] sm:$0xff]
        %v239 = vld [vmem:[%s187 + $0x38] sm:$0xff]
        %v240 = vld [vmem:[%s187 + $0x40] sm:$0xff]
        %v241 = vld [vmem:[%s187 + $0x48] sm:$0xff]
        %v242 = vld [vmem:[%s187 + $0x50] sm:$0xff]
        %v243 = vld [vmem:[%s187 + $0x58] sm:$0xff]
        %v244 = vld [vmem:[%s187 + $0x60] sm:$0xff]
        %v245 = vld [vmem:[%s187 + $0x68] sm:$0xff]
        %v246 = vld [vmem:[%s187 + $0x70] sm:$0xff]
        %v247 = vld [vmem:[%s187 + $0x78] sm:$0xff]
        %v248 = vld [vmem:[%s187 + $0x80] sm:$0xff]
        %v249 = vld [vmem:[%s187 + $0x88] sm:$0xff]
        %v250 = vld [vmem:[%s187 + $0x90] sm:$0xff]
        %v251 = vld [vmem:[%s187 + $0x98] sm:$0xff]
        %v252 = vld [vmem:[%s187 + $0xa0] sm:$0xff]
        %v253 = vld [vmem:[%s187 + $0xa8] sm:$0xff]
        %v254 = vld [vmem:[%s187 + $0xb0] sm:$0xff]
        %v255 = vld [vmem:[%s187 + $0xb8] sm:$0xff]
        %v256 = vld [vmem:[%s187 + $0xc0] sm:$0xff]
        %v257 = vld [vmem:[%s187 + $0xc8] sm:$0xff]
        %v258 = vld [vmem:[%s187 + $0xd0] sm:$0xff]
        %v259 = vld [vmem:[%s187 + $0xd8] sm:$0xff]
        %v260 = vld [vmem:[%s187 + $0xe0] sm:$0xff]
        %v261 = vld [vmem:[%s187 + $0xe8] sm:$0xff]
        %v262 = vld [vmem:[%s187 + $0xf0] sm:$0xff]
        %v263 = vld [vmem:[%s187 + $0xf8] sm:$0xff]
        %v264 = vld [vmem:[%s196] sm:$0xff]
        %v265 = vld [vmem:[%s196 + $0x8] sm:$0xff]
        %v266 = vld [vmem:[%s196 + $0x10] sm:$0xff]
        %v267 = vld [vmem:[%s196 + $0x18] sm:$0xff]
        %v268 = vld [vmem:[%s196 + $0x20] sm:$0xff]
        %v269 = vld [vmem:[%s196 + $0x28] sm:$0xff]
        %v270 = vld [vmem:[%s196 + $0x30] sm:$0xff]
        %v271 = vld [vmem:[%s196 + $0x38] sm:$0xff]
        %v272 = vld [vmem:[%s196 + $0x40] sm:$0xff]
        %v273 = vld [vmem:[%s196 + $0x48] sm:$0xff]
        %v274 = vld [vmem:[%s196 + $0x50] sm:$0xff]
        %v275 = vld [vmem:[%s196 + $0x58] sm:$0xff]
        %v276 = vld [vmem:[%s196 + $0x60] sm:$0xff]
        %v277 = vld [vmem:[%s196 + $0x68] sm:$0xff]
        %v278 = vld [vmem:[%s196 + $0x70] sm:$0xff]
        %v279 = vld [vmem:[%s196 + $0x78] sm:$0xff]
        %v280 = vld [vmem:[%s196 + $0x80] sm:$0xff]
        %v281 = vld [vmem:[%s196 + $0x88] sm:$0xff]
        %v282 = vld [vmem:[%s196 + $0x90] sm:$0xff]
        %v283 = vld [vmem:[%s196 + $0x98] sm:$0xff]
        %v284 = vld [vmem:[%s196 + $0xa0] sm:$0xff]
        %v285 = vld [vmem:[%s196 + $0xa8] sm:$0xff]
        %v286 = vld [vmem:[%s196 + $0xb0] sm:$0xff]
        %v287 = vld [vmem:[%s196 + $0xb8] sm:$0xff]
        %v288 = vld [vmem:[%s196 + $0xc0] sm:$0xff]
        %v289 = vld [vmem:[%s196 + $0xc8] sm:$0xff]
        %v290 = vld [vmem:[%s196 + $0xd0] sm:$0xff]
        %v291 = vld [vmem:[%s196 + $0xd8] sm:$0xff]
        %v292 = vld [vmem:[%s196 + $0xe0] sm:$0xff]
        %v293 = vld [vmem:[%s196 + $0xe8] sm:$0xff]
        %v294 = vld [vmem:[%s196 + $0xf0] sm:$0xff]
        %v295 = vld [vmem:[%s196 + $0xf8] sm:$0xff]
        %v296 = vmax.f32 %v232, 1.1920929e-07
        %v297 = vmax.f32 %v233, 1.1920929e-07
        %v298 = vmax.f32 %v234, 1.1920929e-07
        %v299 = vmax.f32 %v235, 1.1920929e-07
        %v300 = vmax.f32 %v236, 1.1920929e-07
        %v301 = vmax.f32 %v237, 1.1920929e-07
        %v302 = vmax.f32 %v238, 1.1920929e-07
        %v303 = vmax.f32 %v239, 1.1920929e-07
        %v304 = vmax.f32 %v240, 1.1920929e-07
        %v305 = vmax.f32 %v241, 1.1920929e-07
        %v306 = vmax.f32 %v242, 1.1920929e-07
        %v307 = vmax.f32 %v243, 1.1920929e-07
        %v308 = vmax.f32 %v244, 1.1920929e-07
        %v309 = vmax.f32 %v245, 1.1920929e-07
        %v310 = vmax.f32 %v246, 1.1920929e-07
        %v311 = vmax.f32 %v247, 1.1920929e-07
        %v312 = vmax.f32 %v248, 1.1920929e-07
        %v313 = vmax.f32 %v249, 1.1920929e-07
        %v314 = vmax.f32 %v250, 1.1920929e-07
        %v315 = vmax.f32 %v251, 1.1920929e-07
        %v316 = vmax.f32 %v252, 1.1920929e-07
        %v317 = vmax.f32 %v253, 1.1920929e-07
        %v318 = vmax.f32 %v254, 1.1920929e-07
        %v319 = vmax.f32 %v255, 1.1920929e-07
        %v320 = vmax.f32 %v256, 1.1920929e-07
        %v321 = vmax.f32 %v257, 1.1920929e-07
        %v322 = vmax.f32 %v258, 1.1920929e-07
        %v323 = vmax.f32 %v259, 1.1920929e-07
        %v324 = vmax.f32 %v260, 1.1920929e-07
        %v325 = vmax.f32 %v261, 1.1920929e-07
        %v326 = vmax.f32 %v262, 1.1920929e-07
        %v327 = vmax.f32 %v263, 1.1920929e-07
        %v328 = vmin.f32 %v296, 0.9999999
        %v329 = vmin.f32 %v297, 0.9999999
        %v330 = vmin.f32 %v298, 0.9999999
        %v331 = vmin.f32 %v299, 0.9999999
        %v332 = vmin.f32 %v300, 0.9999999
        %v333 = vmin.f32 %v301, 0.9999999
        %v334 = vmin.f32 %v302, 0.9999999
        %v335 = vmin.f32 %v303, 0.9999999
        %v336 = vmin.f32 %v304, 0.9999999
        %v337 = vmin.f32 %v305, 0.9999999
        %v338 = vmin.f32 %v306, 0.9999999
        %v339 = vmin.f32 %v307, 0.9999999
        %v340 = vmin.f32 %v308, 0.9999999
        %v341 = vmin.f32 %v309, 0.9999999
        %v342 = vmin.f32 %v310, 0.9999999
        %v343 = vmin.f32 %v311, 0.9999999
        %v344 = vmin.f32 %v312, 0.9999999
        %v345 = vmin.f32 %v313, 0.9999999
        %v346 = vmin.f32 %v314, 0.9999999
        %v347 = vmin.f32 %v315, 0.9999999
        %v348 = vmin.f32 %v316, 0.9999999
        %v349 = vmin.f32 %v317, 0.9999999
        %v350 = vmin.f32 %v318, 0.9999999
        %v351 = vmin.f32 %v319, 0.9999999
        %v352 = vmin.f32 %v320, 0.9999999
        %v353 = vmin.f32 %v321, 0.9999999
        %v354 = vmin.f32 %v322, 0.9999999
        %v355 = vmin.f32 %v323, 0.9999999
        %v356 = vmin.f32 %v324, 0.9999999
        %v357 = vmin.f32 %v325, 0.9999999
        %v358 = vmin.f32 %v326, 0.9999999
        %v359 = vmin.f32 %v327, 0.9999999
        %v360 = vlog2.pop %v328
        %v361 = vmul.f32 %v360, 0.6931472
        %v362 = vlog2.pop %v329
        %v363 = vmul.f32 %v362, 0.6931472
        %v364 = vlog2.pop %v330
        %v365 = vmul.f32 %v364, 0.6931472
        %v366 = vlog2.pop %v331
        %v367 = vmul.f32 %v366, 0.6931472
        %v368 = vlog2.pop %v332
        %v369 = vmul.f32 %v368, 0.6931472
        %v370 = vlog2.pop %v333
        %v371 = vmul.f32 %v370, 0.6931472
        %v372 = vlog2.pop %v334
        %v373 = vmul.f32 %v372, 0.6931472
        %v374 = vlog2.pop %v335
        %v375 = vmul.f32 %v374, 0.6931472
        %v376 = vlog2.pop %v336
        %v377 = vmul.f32 %v376, 0.6931472
        %v378 = vlog2.pop %v337
        %v379 = vmul.f32 %v378, 0.6931472
        %v380 = vlog2.pop %v338
        %v381 = vmul.f32 %v380, 0.6931472
        %v382 = vlog2.pop %v339
        %v383 = vmul.f32 %v382, 0.6931472
        %v384 = vlog2.pop %v340
        %v385 = vmul.f32 %v384, 0.6931472
        %v386 = vlog2.pop %v341
        %v387 = vmul.f32 %v386, 0.6931472
        %v388 = vlog2.pop %v342
        %v389 = vmul.f32 %v388, 0.6931472
        %v390 = vlog2.pop %v343
        %v391 = vmul.f32 %v390, 0.6931472
        %v392 = vlog2.pop %v344
        %v393 = vmul.f32 %v392, 0.6931472
        %v394 = vlog2.pop %v345
        %v395 = vmul.f32 %v394, 0.6931472
        %v396 = vlog2.pop %v346
        %v397 = vmul.f32 %v396, 0.6931472
        %v398 = vlog2.pop %v347
        %v399 = vmul.f32 %v398, 0.6931472
        %v400 = vlog2.pop %v348
        %v401 = vmul.f32 %v400, 0.6931472
        %v402 = vlog2.pop %v349
        %v403 = vmul.f32 %v402, 0.6931472
        %v404 = vlog2.pop %v350
        %v405 = vmul.f32 %v404, 0.6931472
        %v406 = vlog2.pop %v351
        %v407 = vmul.f32 %v406, 0.6931472
        %v408 = vlog2.pop %v352
        %v409 = vmul.f32 %v408, 0.6931472
        %v410 = vlog2.pop %v353
        %v411 = vmul.f32 %v410, 0.6931472
        %v412 = vlog2.pop %v354
        %v413 = vmul.f32 %v412, 0.6931472
        %v414 = vlog2.pop %v355
        %v415 = vmul.f32 %v414, 0.6931472
        %v416 = vlog2.pop %v356
        %v417 = vmul.f32 %v416, 0.6931472
        %v418 = vlog2.pop %v357
        %v419 = vmul.f32 %v418, 0.6931472
        %v420 = vlog2.pop %v358
        %v421 = vmul.f32 %v420, 0.6931472
        %v422 = vlog2.pop %v359
        %v423 = vmul.f32 %v422, 0.6931472
        %v424 = vmul.f32 %v264, %v361
        %v425 = vmul.f32 %v265, %v363
        %v426 = vmul.f32 %v266, %v365
        %v427 = vmul.f32 %v267, %v367
        %v428 = vmul.f32 %v268, %v369
        %v429 = vmul.f32 %v269, %v371
        %v430 = vmul.f32 %v270, %v373
        %v431 = vmul.f32 %v271, %v375
        %v432 = vmul.f32 %v272, %v377
        %v433 = vmul.f32 %v273, %v379
        %v434 = vmul.f32 %v274, %v381
        %v435 = vmul.f32 %v275, %v383
        %v436 = vmul.f32 %v276, %v385
        %v437 = vmul.f32 %v277, %v387
        %v438 = vmul.f32 %v278, %v389
        %v439 = vmul.f32 %v279, %v391
        %v440 = vmul.f32 %v280, %v393
        %v441 = vmul.f32 %v281, %v395
        %v442 = vmul.f32 %v282, %v397
        %v443 = vmul.f32 %v283, %v399
        %v444 = vmul.f32 %v284, %v401
        %v445 = vmul.f32 %v285, %v403
        %v446 = vmul.f32 %v286, %v405
        %v447 = vmul.f32 %v287, %v407
        %v448 = vmul.f32 %v288, %v409
        %v449 = vmul.f32 %v289, %v411
        %v450 = vmul.f32 %v290, %v413
        %v451 = vmul.f32 %v291, %v415
        %v452 = vmul.f32 %v292, %v417
        %v453 = vmul.f32 %v293, %v419
        %v454 = vmul.f32 %v294, %v421
        %v455 = vmul.f32 %v295, %v423
        %v456 = vsub.f32 1.0, %v264
        %v457 = vsub.f32 1.0, %v265
        %v458 = vsub.f32 1.0, %v266
        %v459 = vsub.f32 1.0, %v267
        %v460 = vsub.f32 1.0, %v268
        %v461 = vsub.f32 1.0, %v269
        %v462 = vsub.f32 1.0, %v270
        %v463 = vsub.f32 1.0, %v271
        %v464 = vsub.f32 1.0, %v272
        %v465 = vsub.f32 1.0, %v273
        %v466 = vsub.f32 1.0, %v274
        %v467 = vsub.f32 1.0, %v275
        %v468 = vsub.f32 1.0, %v276
        %v469 = vsub.f32 1.0, %v277
        %v470 = vsub.f32 1.0, %v278
        %v471 = vsub.f32 1.0, %v279
        %v472 = vsub.f32 1.0, %v280
        %v473 = vsub.f32 1.0, %v281
        %v474 = vsub.f32 1.0, %v282
        %v475 = vsub.f32 1.0, %v283
        %v476 = vsub.f32 1.0, %v284
        %v477 = vsub.f32 1.0, %v285
        %v478 = vsub.f32 1.0, %v286
        %v479 = vsub.f32 1.0, %v287
        %v480 = vsub.f32 1.0, %v288
        %v481 = vsub.f32 1.0, %v289
        %v482 = vsub.f32 1.0, %v290
        %v483 = vsub.f32 1.0, %v291
        %v484 = vsub.f32 1.0, %v292
        %v485 = vsub.f32 1.0, %v293
        %v486 = vsub.f32 1.0, %v294
        %v487 = vsub.f32 1.0, %v295
        %v488 = vsub.f32 1.0, %v328
        %v489 = vsub.f32 1.0, %v329
        %v490 = vsub.f32 1.0, %v330
        %v491 = vsub.f32 1.0, %v331
        %v492 = vsub.f32 1.0, %v332
        %v493 = vsub.f32 1.0, %v333
        %v494 = vsub.f32 1.0, %v334
        %v495 = vsub.f32 1.0, %v335
        %v496 = vsub.f32 1.0, %v336
        %v497 = vsub.f32 1.0, %v337
        %v498 = vsub.f32 1.0, %v338
        %v499 = vsub.f32 1.0, %v339
        %v500 = vsub.f32 1.0, %v340
        %v501 = vsub.f32 1.0, %v341
        %v502 = vsub.f32 1.0, %v342
        %v503 = vsub.f32 1.0, %v343
        %v504 = vsub.f32 1.0, %v344
        %v505 = vsub.f32 1.0, %v345
        %v506 = vsub.f32 1.0, %v346
        %v507 = vsub.f32 1.0, %v347
        %v508 = vsub.f32 1.0, %v348
        %v509 = vsub.f32 1.0, %v349
        %v510 = vsub.f32 1.0, %v350
        %v511 = vsub.f32 1.0, %v351
        %v512 = vsub.f32 1.0, %v352
        %v513 = vsub.f32 1.0, %v353
        %v514 = vsub.f32 1.0, %v354
        %v515 = vsub.f32 1.0, %v355
        %v516 = vsub.f32 1.0, %v356
        %v517 = vsub.f32 1.0, %v357
        %v518 = vsub.f32 1.0, %v358
        %v519 = vsub.f32 1.0, %v359
        %v520 = vlog2.pop %v488
        %v521 = vmul.f32 %v520, 0.6931472
        %v522 = vlog2.pop %v489
        %v523 = vmul.f32 %v522, 0.6931472
        %v524 = vlog2.pop %v490
        %v525 = vmul.f32 %v524, 0.6931472
        %v526 = vlog2.pop %v491
        %v527 = vmul.f32 %v526, 0.6931472
        %v528 = vlog2.pop %v492
        %v529 = vmul.f32 %v528, 0.6931472
        %v530 = vlog2.pop %v493
        %v531 = vmul.f32 %v530, 0.6931472
        %v532 = vlog2.pop %v494
        %v533 = vmul.f32 %v532, 0.6931472
        %v534 = vlog2.pop %v495
        %v535 = vmul.f32 %v534, 0.6931472
        %v536 = vlog2.pop %v496
        %v537 = vmul.f32 %v536, 0.6931472
        %v538 = vlog2.pop %v497
        %v539 = vmul.f32 %v538, 0.6931472
        %v540 = vlog2.pop %v498
        %v541 = vmul.f32 %v540, 0.6931472
        %v542 = vlog2.pop %v499
        %v543 = vmul.f32 %v542, 0.6931472
        %v544 = vlog2.pop %v500
        %v545 = vmul.f32 %v544, 0.6931472
        %v546 = vlog2.pop %v501
        %v547 = vmul.f32 %v546, 0.6931472
        %v548 = vlog2.pop %v502
        %v549 = vmul.f32 %v548, 0.6931472
        %v550 = vlog2.pop %v503
        %v551 = vmul.f32 %v550, 0.6931472
        %v552 = vlog2.pop %v504
        %v553 = vmul.f32 %v552, 0.6931472
        %v554 = vlog2.pop %v505
        %v555 = vmul.f32 %v554, 0.6931472
        %v556 = vlog2.pop %v506
        %v557 = vmul.f32 %v556, 0.6931472
        %v558 = vlog2.pop %v507
        %v559 = vmul.f32 %v558, 0.6931472
        %v560 = vlog2.pop %v508
        %v561 = vmul.f32 %v560, 0.6931472
        %v562 = vlog2.pop %v509
        %v563 = vmul.f32 %v562, 0.6931472
        %v564 = vlog2.pop %v510
        %v565 = vmul.f32 %v564, 0.6931472
        %v566 = vlog2.pop %v511
        %v567 = vmul.f32 %v566, 0.6931472
        %v568 = vlog2.pop %v512
        %v569 = vmul.f32 %v568, 0.6931472
        %v570 = vlog2.pop %v513
        %v571 = vmul.f32 %v570, 0.6931472
        %v572 = vlog2.pop %v514
        %v573 = vmul.f32 %v572, 0.6931472
        %v574 = vlog2.pop %v515
        %v575 = vmul.f32 %v574, 0.6931472
        %v576 = vlog2.pop %v516
        %v577 = vmul.f32 %v576, 0.6931472
        %v578 = vlog2.pop %v517
        %v579 = vmul.f32 %v578, 0.6931472
        %v580 = vlog2.pop %v518
        %v581 = vmul.f32 %v580, 0.6931472
        %v582 = vlog2.pop %v519
        %v583 = vmul.f32 %v582, 0.6931472
        %v584 = vmul.f32 %v456, %v521
        %v585 = vmul.f32 %v457, %v523
        %v586 = vmul.f32 %v458, %v525
        %v587 = vmul.f32 %v459, %v527
        %v588 = vmul.f32 %v460, %v529
        %v589 = vmul.f32 %v461, %v531
        %v590 = vmul.f32 %v462, %v533
        %v591 = vmul.f32 %v463, %v535
        %v592 = vmul.f32 %v464, %v537
        %v593 = vmul.f32 %v465, %v539
        %v594 = vmul.f32 %v466, %v541
        %v595 = vmul.f32 %v467, %v543
        %v596 = vmul.f32 %v468, %v545
        %v597 = vmul.f32 %v469, %v547
        %v598 = vmul.f32 %v470, %v549
        %v599 = vmul.f32 %v471, %v551
        %v600 = vmul.f32 %v472, %v553
        %v601 = vmul.f32 %v473, %v555
        %v602 = vmul.f32 %v474, %v557
        %v603 = vmul.f32 %v475, %v559
        %v604 = vmul.f32 %v476, %v561
        %v605 = vmul.f32 %v477, %v563
        %v606 = vmul.f32 %v478, %v565
        %v607 = vmul.f32 %v479, %v567
        %v608 = vmul.f32 %v480, %v569
        %v609 = vmul.f32 %v481, %v571
        %v610 = vmul.f32 %v482, %v573
        %v611 = vmul.f32 %v483, %v575
        %v612 = vmul.f32 %v484, %v577
        %v613 = vmul.f32 %v485, %v579
        %v614 = vmul.f32 %v486, %v581
        %v615 = vmul.f32 %v487, %v583
        %v616 = vadd.f32 %v424, %v584
        %v617 = vadd.f32 %v425, %v585
        %v618 = vadd.f32 %v426, %v586
        %v619 = vadd.f32 %v427, %v587
        %v620 = vadd.f32 %v428, %v588
        %v621 = vadd.f32 %v429, %v589
        %v622 = vadd.f32 %v430, %v590
        %v623 = vadd.f32 %v431, %v591
        %v624 = vadd.f32 %v432, %v592
        %v625 = vadd.f32 %v433, %v593
        %v626 = vadd.f32 %v434, %v594
        %v627 = vadd.f32 %v435, %v595
        %v628 = vadd.f32 %v436, %v596
        %v629 = vadd.f32 %v437, %v597
        %v630 = vadd.f32 %v438, %v598
        %v631 = vadd.f32 %v439, %v599
        %v632 = vadd.f32 %v440, %v600
        %v633 = vadd.f32 %v441, %v601
        %v634 = vadd.f32 %v442, %v602
        %v635 = vadd.f32 %v443, %v603
        %v636 = vadd.f32 %v444, %v604
        %v637 = vadd.f32 %v445, %v605
        %v638 = vadd.f32 %v446, %v606
        %v639 = vadd.f32 %v447, %v607
        %v640 = vadd.f32 %v448, %v608
        %v641 = vadd.f32 %v449, %v609
        %v642 = vadd.f32 %v450, %v610
        %v643 = vadd.f32 %v451, %v611
        %v644 = vadd.f32 %v452, %v612
        %v645 = vadd.f32 %v453, %v613
        %v646 = vadd.f32 %v454, %v614
        %v647 = vadd.f32 %v455, %v615
        %p648 = scmp.ge.s32.totalorder %s231, 32768
        // Predicated region
        $region41: #{tpu_custom_call.1} parent=27 // pred_check
          %p649 = pneg %p648
        $region42: #{tpu_custom_call.1} parent=27 // pred_check_branch
          %651 = sbr.rel (%p649) target = $region44
        $region43: #{tpu_custom_call.1} parent=27 // pred_region
          %v652 = vld [vmem:[%s221] sm:$0xff]
          %v653 = vadd.f32 %v616, %v617
          %v654 = vadd.f32 %v653, %v618
          %v655 = vadd.f32 %v654, %v619
          %v656 = vadd.f32 %v655, %v620
          %v657 = vadd.f32 %v656, %v621
          %v658 = vadd.f32 %v657, %v622
          %v659 = vadd.f32 %v658, %v623
          %v660 = vadd.f32 %v659, %v624
          %v661 = vadd.f32 %v660, %v625
          %v662 = vadd.f32 %v661, %v626
          %v663 = vadd.f32 %v662, %v627
          %v664 = vadd.f32 %v663, %v628
          %v665 = vadd.f32 %v664, %v629
          %v666 = vadd.f32 %v665, %v630
          %v667 = vadd.f32 %v666, %v631
          %v668 = vadd.f32 %v667, %v632
          %v669 = vadd.f32 %v668, %v633
          %v670 = vadd.f32 %v669, %v634
          %v671 = vadd.f32 %v670, %v635
          %v672 = vadd.f32 %v671, %v636
          %v673 = vadd.f32 %v672, %v637
          %v674 = vadd.f32 %v673, %v638
          %v675 = vadd.f32 %v674, %v639
          %v676 = vadd.f32 %v675, %v640
          %v677 = vadd.f32 %v676, %v641
          %v678 = vadd.f32 %v677, %v642
          %v679 = vadd.f32 %v678, %v643
          %v680 = vadd.f32 %v679, %v644
          %v681 = vadd.f32 %v680, %v645
          %v682 = vadd.f32 %v681, %v646
          %v683 = vadd.f32 %v682, %v647
          %v684 = vadd.f32 %v652, %v683
          %685 = vst [vmem:[%s221] sm:$0xff] %v684
        $region44: #{tpu_custom_call.1} parent=27 // pred_fallthru
          _
        %p686 = scmp.gt.s32.totalorder %s231, 0
        %p687 = scmp.lt.s32.totalorder %s231, 32768
        %p688 = pnand %p686, %p687
        %p689 = pneg %p688
        // Predicated region
        $region45: #{tpu_custom_call.1} parent=27 // pred_check
          _
        $region46: #{tpu_custom_call.1} parent=27 // pred_check_branch
          %691 = sbr.rel (%p688) target = $region48
        $region47: #{tpu_custom_call.1} parent=27 // pred_region
          %v692 = vlaneseq
          %v693 = vshrl.u32 %v692, 7
          %v694 = vadd.s32 %v693, 8
          %v695 = vadd.s32 %v693, 16
          %v696 = vadd.s32 %v693, 24
          %v697 = vadd.s32 %v693, 32
          %v698 = vadd.s32 %v693, 40
          %v699 = vadd.s32 %v693, 48
          %v700 = vadd.s32 %v693, 56
          %v701 = vadd.s32 %v693, 64
          %v702 = vadd.s32 %v693, 72
          %v703 = vadd.s32 %v693, 80
          %v704 = vadd.s32 %v693, 88
          %v705 = vadd.s32 %v693, 96
          %v706 = vadd.s32 %v693, 104
          %v707 = vadd.s32 %v693, 112
          %v708 = vadd.s32 %v693, 120
          %v709 = vadd.s32 %v693, 128
          %v710 = vadd.s32 %v693, 136
          %v711 = vadd.s32 %v693, 144
          %v712 = vadd.s32 %v693, 152
          %v713 = vadd.s32 %v693, 160
          %v714 = vadd.s32 %v693, 168
          %v715 = vadd.s32 %v693, 176
          %v716 = vadd.s32 %v693, 184
          %v717 = vadd.s32 %v693, 192
          %v718 = vadd.s32 %v693, 200
          %v719 = vadd.s32 %v693, 208
          %v720 = vadd.s32 %v693, 216
          %v721 = vadd.s32 %v693, 224
          %v722 = vadd.s32 %v693, 232
          %v723 = vadd.s32 %v693, 240
          %v724 = vadd.s32 %v693, 248
          %v725 = vlaneseq
          %v726 = vand.u32 %v725, 127
          %v727 = vmul.u32 %v693, 128
          %v728 = vmul.u32 %v694, 128
          %v729 = vmul.u32 %v695, 128
          %v730 = vmul.u32 %v696, 128
          %v731 = vmul.u32 %v697, 128
          %v732 = vmul.u32 %v698, 128
          %v733 = vmul.u32 %v699, 128
          %v734 = vmul.u32 %v700, 128
          %v735 = vmul.u32 %v701, 128
          %v736 = vmul.u32 %v702, 128
          %v737 = vmul.u32 %v703, 128
          %v738 = vmul.u32 %v704, 128
          %v739 = vmul.u32 %v705, 128
          %v740 = vmul.u32 %v706, 128
          %v741 = vmul.u32 %v707, 128
          %v742 = vmul.u32 %v708, 128
          %v743 = vmul.u32 %v709, 128
          %v744 = vmul.u32 %v710, 128
          %v745 = vmul.u32 %v711, 128
          %v746 = vmul.u32 %v712, 128
          %v747 = vmul.u32 %v713, 128
          %v748 = vmul.u32 %v714, 128
          %v749 = vmul.u32 %v715, 128
          %v750 = vmul.u32 %v716, 128
          %v751 = vmul.u32 %v717, 128
          %v752 = vmul.u32 %v718, 128
          %v753 = vmul.u32 %v719, 128
          %v754 = vmul.u32 %v720, 128
          %v755 = vmul.u32 %v721, 128
          %v756 = vmul.u32 %v722, 128
          %v757 = vmul.u32 %v723, 128
          %v758 = vmul.u32 %v724, 128
          %v759 = vadd.s32 %v727, %v726
          %v760 = vadd.s32 %v728, %v726
          %v761 = vadd.s32 %v729, %v726
          %v762 = vadd.s32 %v730, %v726
          %v763 = vadd.s32 %v731, %v726
          %v764 = vadd.s32 %v732, %v726
          %v765 = vadd.s32 %v733, %v726
          %v766 = vadd.s32 %v734, %v726
          %v767 = vadd.s32 %v735, %v726
          %v768 = vadd.s32 %v736, %v726
          %v769 = vadd.s32 %v737, %v726
          %v770 = vadd.s32 %v738, %v726
          %v771 = vadd.s32 %v739, %v726
          %v772 = vadd.s32 %v740, %v726
          %v773 = vadd.s32 %v741, %v726
          %v774 = vadd.s32 %v742, %v726
          %v775 = vadd.s32 %v743, %v726
          %v776 = vadd.s32 %v744, %v726
          %v777 = vadd.s32 %v745, %v726
          %v778 = vadd.s32 %v746, %v726
          %v779 = vadd.s32 %v747, %v726
          %v780 = vadd.s32 %v748, %v726
          %v781 = vadd.s32 %v749, %v726
          %v782 = vadd.s32 %v750, %v726
          %v783 = vadd.s32 %v751, %v726
          %v784 = vadd.s32 %v752, %v726
          %v785 = vadd.s32 %v753, %v726
          %v786 = vadd.s32 %v754, %v726
          %v787 = vadd.s32 %v755, %v726
          %v788 = vadd.s32 %v756, %v726
          %v789 = vadd.s32 %v757, %v726
          %v790 = vadd.s32 %v758, %v726
          %v791 = vstv %s231
          %vm792 = vcmp.lt.s32.totalorder %v759, %v791
          %vm793 = vcmp.lt.s32.totalorder %v760, %v791
          %vm794 = vcmp.lt.s32.totalorder %v761, %v791
          %vm795 = vcmp.lt.s32.totalorder %v762, %v791
          %vm796 = vcmp.lt.s32.totalorder %v763, %v791
          %vm797 = vcmp.lt.s32.totalorder %v764, %v791
          %vm798 = vcmp.lt.s32.totalorder %v765, %v791
          %vm799 = vcmp.lt.s32.totalorder %v766, %v791
          %vm800 = vcmp.lt.s32.totalorder %v767, %v791
          %vm801 = vcmp.lt.s32.totalorder %v768, %v791
          %vm802 = vcmp.lt.s32.totalorder %v769, %v791
          %vm803 = vcmp.lt.s32.totalorder %v770, %v791
          %vm804 = vcmp.lt.s32.totalorder %v771, %v791
          %vm805 = vcmp.lt.s32.totalorder %v772, %v791
          %vm806 = vcmp.lt.s32.totalorder %v773, %v791
          %vm807 = vcmp.lt.s32.totalorder %v774, %v791
          %vm808 = vcmp.lt.s32.totalorder %v775, %v791
          %vm809 = vcmp.lt.s32.totalorder %v776, %v791
          %vm810 = vcmp.lt.s32.totalorder %v777, %v791
          %vm811 = vcmp.lt.s32.totalorder %v778, %v791
          %vm812 = vcmp.lt.s32.totalorder %v779, %v791
          %vm813 = vcmp.lt.s32.totalorder %v780, %v791
          %vm814 = vcmp.lt.s32.totalorder %v781, %v791
          %vm815 = vcmp.lt.s32.totalorder %v782, %v791
          %vm816 = vcmp.lt.s32.totalorder %v783, %v791
          %vm817 = vcmp.lt.s32.totalorder %v784, %v791
          %vm818 = vcmp.lt.s32.totalorder %v785, %v791
          %vm819 = vcmp.lt.s32.totalorder %v786, %v791
          %vm820 = vcmp.lt.s32.totalorder %v787, %v791
          %vm821 = vcmp.lt.s32.totalorder %v788, %v791
          %vm822 = vcmp.lt.s32.totalorder %v789, %v791
          %vm823 = vcmp.lt.s32.totalorder %v790, %v791
          %v824 = vld [vmem:[%s221] sm:$0xff]
          %v825 = vsel %vm792, %v616, 0.0
          %v826 = vsel %vm793, %v617, 0.0
          %v827 = vsel %vm794, %v618, 0.0
          %v828 = vsel %vm795, %v619, 0.0
          %v829 = vsel %vm796, %v620, 0.0
          %v830 = vsel %vm797, %v621, 0.0
          %v831 = vsel %vm798, %v622, 0.0
          %v832 = vsel %vm799, %v623, 0.0
          %v833 = vsel %vm800, %v624, 0.0
          %v834 = vsel %vm801, %v625, 0.0
          %v835 = vsel %vm802, %v626, 0.0
          %v836 = vsel %vm803, %v627, 0.0
          %v837 = vsel %vm804, %v628, 0.0
          %v838 = vsel %vm805, %v629, 0.0
          %v839 = vsel %vm806, %v630, 0.0
          %v840 = vsel %vm807, %v631, 0.0
          %v841 = vsel %vm808, %v632, 0.0
          %v842 = vsel %vm809, %v633, 0.0
          %v843 = vsel %vm810, %v634, 0.0
          %v844 = vsel %vm811, %v635, 0.0
          %v845 = vsel %vm812, %v636, 0.0
          %v846 = vsel %vm813, %v637, 0.0
          %v847 = vsel %vm814, %v638, 0.0
          %v848 = vsel %vm815, %v639, 0.0
          %v849 = vsel %vm816, %v640, 0.0
          %v850 = vsel %vm817, %v641, 0.0
          %v851 = vsel %vm818, %v642, 0.0
          %v852 = vsel %vm819, %v643, 0.0
          %v853 = vsel %vm820, %v644, 0.0
          %v854 = vsel %vm821, %v645, 0.0
          %v855 = vsel %vm822, %v646, 0.0
          %v856 = vsel %vm823, %v647, 0.0
          %v857 = vadd.f32 %v825, %v826
          %v858 = vadd.f32 %v857, %v827
          %v859 = vadd.f32 %v858, %v828
          %v860 = vadd.f32 %v859, %v829
          %v861 = vadd.f32 %v860, %v830
          %v862 = vadd.f32 %v861, %v831
          %v863 = vadd.f32 %v862, %v832
          %v864 = vadd.f32 %v863, %v833
          %v865 = vadd.f32 %v864, %v834
          %v866 = vadd.f32 %v865, %v835
          %v867 = vadd.f32 %v866, %v836
          %v868 = vadd.f32 %v867, %v837
          %v869 = vadd.f32 %v868, %v838
          %v870 = vadd.f32 %v869, %v839
          %v871 = vadd.f32 %v870, %v840
          %v872 = vadd.f32 %v871, %v841
          %v873 = vadd.f32 %v872, %v842
          %v874 = vadd.f32 %v873, %v843
          %v875 = vadd.f32 %v874, %v844
          %v876 = vadd.f32 %v875, %v845
          %v877 = vadd.f32 %v876, %v846
          %v878 = vadd.f32 %v877, %v847
          %v879 = vadd.f32 %v878, %v848
          %v880 = vadd.f32 %v879, %v849
          %v881 = vadd.f32 %v880, %v850
          %v882 = vadd.f32 %v881, %v851
          %v883 = vadd.f32 %v882, %v852
          %v884 = vadd.f32 %v883, %v853
          %v885 = vadd.f32 %v884, %v854
          %v886 = vadd.f32 %v885, %v855
          %v887 = vadd.f32 %v886, %v856
          %v888 = vadd.f32 %v824, %v887
          %889 = vst [vmem:[%s221] sm:$0xff] %v888
        $region48: #{tpu_custom_call.1} parent=27 // pred_fallthru
          _
        %s890 = sand.u32 %s98, 1
        %s891 = scalar_lea.sflag [#allocation4], %s890
        %s892 = sand.u32 %s98, 1
        %s893 = smul.addr %s892, 8
        %s894 = scalar_lea.vmem [#allocation7], %s893
        // Predicated region
        $region49: #{tpu_custom_call.1} parent=27 // pred_check
          %p895 = pneg %p108
        $region50: #{tpu_custom_call.1} parent=27 // pred_check_branch
          %897 = sbr.rel (%p895) target = $region52
        $region51: #{tpu_custom_call.1} parent=27 // pred_region
          %s899 = ssub.s32 128, 128
          %900 = vsyncadd %s891, %s899
          %s901 = smul.addr %s26, 128
          %s902 = scalar_lea.hbm %s2, %s901
          %s904 = sshll.u32 %s894, 4
          %s905 = int_to_ptr.vmem [resolvable:$true] %s904
          %907 = dma.vmem_to_hbm [thread:$0]  %s905, 128, %s902, %s891
        $region52: #{tpu_custom_call.1} parent=27 // pred_fallthru
          _
      $region28: #{tpu_custom_call.1} parent=5 // pred_fallthru
        _
      %p908 = scmp.le.s32.totalorder 2, %s17
      // Predicated region
      $region53: #{tpu_custom_call.1} parent=5 // pred_check
        %p909 = pneg %p908
      $region54: #{tpu_custom_call.1} parent=5 // pred_check_branch
        %911 = sbr.rel (%p909) target = $region56
      $region55: #{tpu_custom_call.1} parent=5 // pred_region
        %s912 = ssub.s32 %s17, 2
        // Predicated region
        $region57: #{tpu_custom_call.1} parent=55 // pred_check
          %p913 = pneg %p114
        $region58: #{tpu_custom_call.1} parent=55 // pred_check_branch
          %915 = sbr.rel (%p913) target = $region60
        $region59: #{tpu_custom_call.1} parent=55 // pred_region
          %s916 = sand.u32 %s99, 1
          %s917 = scalar_lea.sflag [#allocation4], %s916
          %s918 = sand.u32 %s99, 1
          %s919 = smul.addr %s918, 8
          %s920 = scalar_lea.vmem [#allocation7], %s919
          %921 = dma.done %s917, 128
        $region60: #{tpu_custom_call.1} parent=55 // pred_fallthru
          _
      $region56: #{tpu_custom_call.1} parent=5 // pred_fallthru
        _
    $region6: #{tpu_custom_call.1} parent=1 // loop_footer
      %s21 = sadd.s32 1, %s17
    $region7: #{tpu_custom_call.1} parent=1 // loop_footer_branch
      %16 = sbr.rel target = $region3
    $region8: #{tpu_custom_call.1} parent=1 // loop_exit
      _
    %922 = vsyncpa [#allocation3], 1
    %s923 = scalar_lea.sflag [#allocation3], 1
    %924 = vsyncpa %s923, 1
    %925 = vsyncpa [#allocation6], 1
    %s926 = scalar_lea.sflag [#allocation6], 1
    %927 = vsyncpa %s926, 1
    %928 = vsyncpa [#allocation4], 1
    %s929 = scalar_lea.sflag [#allocation4], 1
    %930 = vsyncpa %s929, 1

</llo_original>
